<compile_context>
chip_gen: v7x
topology: tpu7x:2x2x1
jax: 0.10.0
libtpu: 0.0.40
codegen_flags: <defaults>
</compile_context>

<pallas_src>
import jax
import jax.numpy as jnp
from jax.experimental import pallas as pl
from jax.experimental.pallas import tpu as pltpu

LANE = 128           # TPU lane width
SUBLANE = 8          # f32 sublane count
MAX_ROWS = 4096      # rows of 128 lanes per grid step (512K batch elems, 16 MiB dbl-buffered)
SMALL_N_THRESHOLD = 512  # below this, skip Pallas entirely (launch + layout cost dominates)


def folded_mlp_kernel(wb_ref, x_ref, o_ref):
    # wb_ref : SMEM (4,)        = [w0, w1, w2, b]   (folded affine map)
    # x_ref  : VMEM (3, Rt, 128) dense feature slabs, batch = row*128 + lane
    # o_ref  : VMEM (Rt, 128)
    w0 = wb_ref[0]
    w1 = wb_ref[1]
    w2 = wb_ref[2]
    b = wb_ref[3]
    o_ref[...] = x_ref[0] * w0 + x_ref[1] * w1 + x_ref[2] * w2 + b


def mlp_forward(x, w1, b1, w2, b2, w3, b3, *, max_rows=MAX_ROWS, force_pallas=False):
    """x: (N, 3) f32.  Weights stored (in, out); biases (1, out). Returns (N, 1)."""
    n = x.shape[0]

    # Fold the three linear layers (no nonlinearities) into one affine map.
    w_fold = w1 @ w2 @ w3                 # (3, 1)
    b_fold = (b1 @ w2 + b2) @ w3 + b3     # (1, 1)

    # Small-N fast path: pure XLA, zero extra copies / launches.
    if n < SMALL_N_THRESHOLD and not force_pallas:
        return x @ w_fold + b_fold

    wb = jnp.concatenate([w_fold[:, 0], b_fold[0]], axis=0)   # (4,) = [w0,w1,w2,b]

    # Sublane-dense slab: pad batch only to a multiple of 8*128 = 1024 elements,
    # then transpose+reshape in one fused XLA copy -> (3, R, 128).
    r = pl.cdiv(n, LANE)                   # rows of 128 lanes
    r_pad = pl.cdiv(r, SUBLANE) * SUBLANE  # rows padded to a multiple of 8
    n_pad = r_pad * LANE
    x_slab = jnp.pad(x, ((0, n_pad - n), (0, 0))).T.reshape(3, r_pad, LANE)

    rows_per_tile = min(max_rows, r_pad)   # always a multiple of 8
    grid = (pl.cdiv(r_pad, rows_per_tile),)  # partial last block handled by Pallas masking

    out = pl.pallas_call(
        folded_mlp_kernel,
        out_shape=jax.ShapeDtypeStruct((r_pad, LANE), jnp.float32),
        grid=grid,
        in_specs=[
            pl.BlockSpec(memory_space=pltpu.MemorySpace.SMEM),            # folded scalars
            pl.BlockSpec((3, rows_per_tile, LANE), lambda i: (0, i, 0)),  # dense x slab tile
        ],
        out_specs=pl.BlockSpec((rows_per_tile, LANE), lambda i: (i, 0)),
        compiler_params=pltpu.CompilerParams(
            dimension_semantics=("parallel",),
            vmem_limit_bytes=32 << 20,
        ),
    )(wb, x_slab)

    # (R,128) row-major flatten restores batch order; slice off lane padding.
    return out.reshape(-1)[:n].reshape(n, 1)


def init_linear_params(key, in_features, out_features):
    # Matches PyTorch nn.Linear default init: U(-1/sqrt(fan_in), +1/sqrt(fan_in)).
    kw, kb = jax.random.split(key)
    bound = 1.0 / (in_features ** 0.5)
    # Stored as (in, out) so forward is x @ W  (== x @ weight.T in PyTorch).
    w = jax.random.uniform(kw, (in_features, out_features), jnp.float32, -bound, bound)
    b = jax.random.uniform(kb, (1, out_features), jnp.float32, -bound, bound)
    return w, b


def reference_forward(x, w1, b1, w2, b2, w3, b3):
    h = x @ w1 + b1
    h = h @ w2 + b2
    return h @ w3 + b3


if __name__ == "__main__":
    key = jax.random.PRNGKey(0)
    k_x, k_x2, k_x3, k_x4, k1, k2, k3 = jax.random.split(key, 7)

    w1, b1 = init_linear_params(k1, 3, 16)
    w2, b2 = init_linear_params(k2, 16, 16)
    w3, b3 = init_linear_params(k3, 16, 1)

    # 1) Small case (matches the module's expected (batch, 3) input) -> XLA fast path.
    batch = 8
    x = jax.random.normal(k_x, (batch, 3), dtype=jnp.float32)
    out = mlp_forward(x, w1, b1, w2, b2, w3, b3)
    jax.block_until_ready(out)
    ref = reference_forward(x, w1, b1, w2, b2, w3, b3)
    assert out.shape == (batch, 1), out.shape
    assert jnp.allclose(out, ref, atol=1e-5, rtol=1e-5), "mismatch (batch=8)"

    # 2) Non-multiple-of-128 batch through the Pallas path (single partial-padded tile).
    batch2 = 4097
    x2 = jax.random.normal(k_x2, (batch2, 3), dtype=jnp.float32)
    out2 = mlp_forward(x2, w1, b1, w2, b2, w3, b3)
    jax.block_until_ready(out2)
    ref2 = reference_forward(x2, w1, b1, w2, b2, w3, b3)
    assert out2.shape == (batch2, 1), out2.shape
    assert jnp.allclose(out2, ref2, atol=1e-5, rtol=1e-5), "mismatch (batch=4097)"

    # 3) Multi-tile grid with a partial last block (small max_rows to keep shapes tiny).
    batch3 = 2349
    x3 = jax.random.normal(k_x3, (batch3, 3), dtype=jnp.float32)
    out3 = mlp_forward(x3, w1, b1, w2, b2, w3, b3, max_rows=16, force_pallas=True)
    jax.block_until_ready(out3)
    ref3 = reference_forward(x3, w1, b1, w2, b2, w3, b3)
    assert out3.shape == (batch3, 1), out3.shape
    assert jnp.allclose(out3, ref3, atol=1e-5, rtol=1e-5), "mismatch (batch=2349)"

    # 4) Tiny batch forced through the Pallas path (exercises lane padding end-to-end).
    batch4 = 300
    x4 = jax.random.normal(k_x4, (batch4, 3), dtype=jnp.float32)
    out4 = mlp_forward(x4, w1, b1, w2, b2, w3, b3, force_pallas=True)
    jax.block_until_ready(out4)
    ref4 = reference_forward(x4, w1, b1, w2, b2, w3, b3)
    assert out4.shape == (batch4, 1), out4.shape
    assert jnp.allclose(out4, ref4, atol=1e-5, rtol=1e-5), "mismatch (batch=300)"

    print("KERNEL_OK")
</pallas_src>

<mosaic_0001>
module attributes {stable_mosaic.version = 11 : i64} {
  func.func @folded_mlp_kernel(%arg0: i32, %arg1: memref<4xf32, #tpu.memory_space<smem>>, %arg2: memref<3x40x128xf32, #tpu.memory_space<vmem>>, %arg3: memref<40x128xf32, #tpu.memory_space<vmem>>) attributes {dimension_semantics = [#tpu.dimension_semantics<parallel>], iteration_bounds = array<i64: 1>, scalar_prefetch = 0 : i64, scratch_operands = 0 : i64, tpu.core_type = #tpu.core_type<tc>, window_params = [{transform_indices = @transform_0, window_bounds = array<i64: 4>}, {transform_indices = @transform_1, window_bounds = array<i64: 3, 40, 128>}, {transform_indices = @transform_2, window_bounds = array<i64: 40, 128>}]} {
    %c0 = arith.constant 0 : index
    %0 = memref.load %arg1[%c0] : memref<4xf32, #tpu.memory_space<smem>>
    %c1 = arith.constant 1 : index
    %1 = memref.load %arg1[%c1] : memref<4xf32, #tpu.memory_space<smem>>
    %c2 = arith.constant 2 : index
    %2 = memref.load %arg1[%c2] : memref<4xf32, #tpu.memory_space<smem>>
    %c3 = arith.constant 3 : index
    %3 = memref.load %arg1[%c3] : memref<4xf32, #tpu.memory_space<smem>>
    %c0_0 = arith.constant 0 : index
    %c0_1 = arith.constant 0 : index
    %c0_2 = arith.constant 0 : index
    %4 = vector.load %arg2[%c0_0, %c0_1, %c0_2] : memref<3x40x128xf32, #tpu.memory_space<vmem>>, vector<1x40x128xf32>
    %5 = vector.shape_cast %4 : vector<1x40x128xf32> to vector<40x128xf32>
    %6 = vector.broadcast %0 : f32 to vector<40x128xf32>
    %7 = arith.mulf %5, %6 : vector<40x128xf32>
    %c1_3 = arith.constant 1 : index
    %c0_4 = arith.constant 0 : index
    %c0_5 = arith.constant 0 : index
    %8 = vector.load %arg2[%c1_3, %c0_4, %c0_5] : memref<3x40x128xf32, #tpu.memory_space<vmem>>, vector<1x40x128xf32>
    %9 = vector.shape_cast %8 : vector<1x40x128xf32> to vector<40x128xf32>
    %10 = vector.broadcast %1 : f32 to vector<40x128xf32>
    %11 = arith.mulf %9, %10 : vector<40x128xf32>
    %12 = arith.addf %7, %11 : vector<40x128xf32>
    %c2_6 = arith.constant 2 : index
    %c0_7 = arith.constant 0 : index
    %c0_8 = arith.constant 0 : index
    %13 = vector.load %arg2[%c2_6, %c0_7, %c0_8] : memref<3x40x128xf32, #tpu.memory_space<vmem>>, vector<1x40x128xf32>
    %14 = vector.shape_cast %13 : vector<1x40x128xf32> to vector<40x128xf32>
    %15 = vector.broadcast %2 : f32 to vector<40x128xf32>
    %16 = arith.mulf %14, %15 : vector<40x128xf32>
    %17 = arith.addf %12, %16 : vector<40x128xf32>
    %18 = vector.broadcast %3 : f32 to vector<40x128xf32>
    %19 = arith.addf %17, %18 : vector<40x128xf32>
    %c0_9 = arith.constant 0 : index
    %c0_10 = arith.constant 0 : index
    %20 = vector.load %arg3[%c0_9, %c0_10] : memref<40x128xf32, #tpu.memory_space<vmem>>, vector<40x128xf32>
    tpu.vector_store %arg3[%c0_9, %c0_10], %19 {strides = array<i32>} : memref<40x128xf32, #tpu.memory_space<vmem>>, vector<40x128xf32>,
    return
  }
  func.func @transform_0(%arg0: i32) -> i32 {
    %c0_i32 = arith.constant 0 : i32
    %c0_i32_0 = arith.constant 0 : i32
    return %c0_i32 : i32
  }
  func.func @transform_1(%arg0: i32) -> (i32, i32, i32) {
    %c0_i32 = arith.constant 0 : i32
    %c0_i32_0 = arith.constant 0 : i32
    %c0_i32_1 = arith.constant 0 : i32
    return %c0_i32, %arg0, %c0_i32_0 : i32, i32, i32
  }
  func.func @transform_2(%arg0: i32) -> (i32, i32) {
    %c0_i32 = arith.constant 0 : i32
    %c0_i32_0 = arith.constant 0 : i32
    return %arg0, %c0_i32 : i32, i32
  }
}

</mosaic_0001>

<llo_original>
// kernel: tpu_custom_call.1
$region0: #{tpu_custom_call.1}
  #allocation0 [shape = 'u32[]', space=smem, size = 0x4, offset = 0x4, fixed_abs, tag = 'smem constant byte address 0x4 - core index']
  #allocation1 [shape = 'u32[144,128]{1,0:T(1,128)}', space=vmem, size = 0x12000, scoped, tag = 'internal scratch']
  %s0 = inlined_call_operand.hbm [shape: f32[4], index: 0, kind: input, shape index: {}]
  %s1 = inlined_call_operand.hbm [shape: f32[3,40,128], index: 1, kind: input, shape index: {}]
  %s2 = inlined_call_operand.hbm [shape: f32[40,128], index: 2, kind: output, shape index: {}]
  %s3 = sld [smem:[#allocation0]]
  $region26: #{tpu_custom_call.1} parent=0
    _
  %s5 = ssub.s32 1, %s3
  %s6 = scalar_select 0, %s5, %s3
  $region1: #{tpu_custom_call.1} parent=0
    #allocation2 [shape = 'u8[512]{0}', space=smem, size = 0x200, scoped, tag = 'input window, operand 0, single buffered']
    #allocation3 [shape = 's32[1]{0}', space=sflag, size = 0x4, scoped, tag = 'scoped memory for tpu_custom_call.1']
    #allocation4 [shape = 's32[1]{0}', space=sflag, size = 0x4, scoped, tag = 'scoped memory for tpu_custom_call.1']
    #allocation5 [shape = 's32[1]{0}', space=sflag, size = 0x4, scoped, tag = 'scoped memory for tpu_custom_call.1']
    #allocation6 [shape = 'u8[61440]{0}', space=vmem, size = 0xf000, scoped, tag = 'input window, operand 1, single buffered']
    #allocation7 [shape = 'u8[20480]{0}', space=vmem, size = 0x5000, scoped, tag = 'output window, operand 0, single buffered']
    %7 = vsyncpa [#allocation5], 0
    %8 = vsyncpa [#allocation3], 0
    %9 = vsyncpa [#allocation4], 0
    // Predicated region
    $region2: #{tpu_custom_call.1} parent=1 // pred_check
      _
    $region3: #{tpu_custom_call.1} parent=1 // pred_check_branch
      %11 = sbr.rel (0) target = $region5
    $region4: #{tpu_custom_call.1} parent=1 // pred_region
      %s13 = ssub.s32 16, 16
      %14 = vsyncadd [#allocation5], %s13
      %17 = dma.hbm_to_smem %s0, 16, [#allocation2], [#allocation5]
    $region5: #{tpu_custom_call.1} parent=1 // pred_fallthru
      _
    // Predicated region
    $region6: #{tpu_custom_call.1} parent=1 // pred_check
      _
    $region7: #{tpu_custom_call.1} parent=1 // pred_check_branch
      %19 = sbr.rel (0) target = $region9
    $region8: #{tpu_custom_call.1} parent=1 // pred_region
      %s21 = ssub.s32 1920, 1920
      %22 = vsyncadd [#allocation3], %s21
      %s23 = sshll.u32 [#allocation6], 4
      %s24 = int_to_ptr.vmem [resolvable:$true] %s23
      %29 = dma.hbm_to_vmem [thread:$0]  %s1, 1920, %s24, [#allocation3], 128, 128, 8
    $region9: #{tpu_custom_call.1} parent=1 // pred_fallthru
      _
    // Predicated region
    $region10: #{tpu_custom_call.1} parent=1 // pred_check
      _
    $region11: #{tpu_custom_call.1} parent=1 // pred_check_branch
      %31 = sbr.rel (0) target = $region13
    $region12: #{tpu_custom_call.1} parent=1 // pred_region
      %32 = dma.done [#allocation5], 16
    $region13: #{tpu_custom_call.1} parent=1 // pred_fallthru
      _
    // Predicated region
    $region14: #{tpu_custom_call.1} parent=1 // pred_check
      _
    $region15: #{tpu_custom_call.1} parent=1 // pred_check_branch
      %34 = sbr.rel (0) target = $region17
    $region16: #{tpu_custom_call.1} parent=1 // pred_region
      %35 = dma.done [#allocation3], 1920
    $region17: #{tpu_custom_call.1} parent=1 // pred_fallthru
      _
    %36 = sfence
    %s37 = sld [smem:[#allocation2]]
    %s38 = sld [smem:[#allocation2 + $0x1]]
    %s39 = sld [smem:[#allocation2 + $0x2]]
    %s40 = sld [smem:[#allocation2 + $0x3]]
    %v41 = vld [vmem:[#allocation6] sm:$0xff]
    %v42 = vld [vmem:[#allocation6 + $0x8] sm:$0xff]
    %v43 = vld [vmem:[#allocation6 + $0x10] sm:$0xff]
    %v44 = vld [vmem:[#allocation6 + $0x18] sm:$0xff]
    %v45 = vld [vmem:[#allocation6 + $0x20] sm:$0xff]
    %v46 = vstv %s37
    %v47 = vmul.f32 %v41, %v46
    %v48 = vmul.f32 %v42, %v46
    %v49 = vmul.f32 %v43, %v46
    %v50 = vmul.f32 %v44, %v46
    %v51 = vmul.f32 %v45, %v46
    %s52 = scalar_lea.vmem [#allocation6], 40
    %v53 = vld [vmem:[%s52] sm:$0xff]
    %v54 = vld [vmem:[%s52 + $0x8] sm:$0xff]
    %v55 = vld [vmem:[%s52 + $0x10] sm:$0xff]
    %v56 = vld [vmem:[%s52 + $0x18] sm:$0xff]
    %v57 = vld [vmem:[%s52 + $0x20] sm:$0xff]
    %v58 = vstv %s38
    %v59 = vmul.f32 %v53, %v58
    %v60 = vmul.f32 %v54, %v58
    %v61 = vmul.f32 %v55, %v58
    %v62 = vmul.f32 %v56, %v58
    %v63 = vmul.f32 %v57, %v58
    %v64 = vadd.f32 %v47, %v59
    %v65 = vadd.f32 %v48, %v60
    %v66 = vadd.f32 %v49, %v61
    %v67 = vadd.f32 %v50, %v62
    %v68 = vadd.f32 %v51, %v63
    %s69 = scalar_lea.vmem [#allocation6], 80
    %v70 = vld [vmem:[%s69] sm:$0xff]
    %v71 = vld [vmem:[%s69 + $0x8] sm:$0xff]
    %v72 = vld [vmem:[%s69 + $0x10] sm:$0xff]
    %v73 = vld [vmem:[%s69 + $0x18] sm:$0xff]
    %v74 = vld [vmem:[%s69 + $0x20] sm:$0xff]
    %v75 = vstv %s39
    %v76 = vmul.f32 %v70, %v75
    %v77 = vmul.f32 %v71, %v75
    %v78 = vmul.f32 %v72, %v75
    %v79 = vmul.f32 %v73, %v75
    %v80 = vmul.f32 %v74, %v75
    %v81 = vadd.f32 %v64, %v76
    %v82 = vadd.f32 %v65, %v77
    %v83 = vadd.f32 %v66, %v78
    %v84 = vadd.f32 %v67, %v79
    %v85 = vadd.f32 %v68, %v80
    %v86 = vstv %s40
    %v87 = vadd.f32 %v81, %v86
    %v88 = vadd.f32 %v82, %v86
    %v89 = vadd.f32 %v83, %v86
    %v90 = vadd.f32 %v84, %v86
    %v91 = vadd.f32 %v85, %v86
    %92 = vst [vmem:[#allocation7] sm:$0xff] %v87
    %93 = vst [vmem:[#allocation7 + $0x8] sm:$0xff] %v88
    %94 = vst [vmem:[#allocation7 + $0x10] sm:$0xff] %v89
    %95 = vst [vmem:[#allocation7 + $0x18] sm:$0xff] %v90
    %96 = vst [vmem:[#allocation7 + $0x20] sm:$0xff] %v91
    // Predicated region
    $region18: #{tpu_custom_call.1} parent=1 // pred_check
      _
    $region19: #{tpu_custom_call.1} parent=1 // pred_check_branch
      %98 = sbr.rel (0) target = $region21
    $region20: #{tpu_custom_call.1} parent=1 // pred_region
      %s100 = ssub.s32 640, 640
      %101 = vsyncadd [#allocation4], %s100
      %s102 = sshll.u32 [#allocation7], 4
      %s103 = int_to_ptr.vmem [resolvable:$true] %s102
      %108 = dma.vmem_to_hbm [thread:$0]  %s103, 640, %s2, [#allocation4], 128, 128, 8
    $region21: #{tpu_custom_call.1} parent=1 // pred_fallthru
      _
    // Predicated region
    $region22: #{tpu_custom_call.1} parent=1 // pred_check
      _
    $region23: #{tpu_custom_call.1} parent=1 // pred_check_branch
      %110 = sbr.rel (0) target = $region25
    $region24: #{tpu_custom_call.1} parent=1 // pred_region
      %111 = dma.done [#allocation4], 640
    $region25: #{tpu_custom_call.1} parent=1 // pred_fallthru
      _
    %112 = vsyncpa [#allocation3], 1
    %113 = vsyncpa [#allocation4], 1
    %114 = vsyncpa [#allocation5], 1

</llo_original>
